<compile_context>
chip_gen: v7x
topology: tpu7x:2x2x1
jax: 0.10.0
libtpu: 0.0.40
codegen_flags: <defaults>
</compile_context>

<pallas_src>
import math

import jax
import jax.numpy as jnp
from jax.experimental import pallas as pl
from jax.experimental.pallas import tpu as pltpu

BETA = 0.1               # SmoothL1Loss(beta=0.1)
LOC_LOSS_WEIGHT = 0.05   # SmoothL1Loss(loss_weight=0.05)
DICE_LOSS_WEIGHT = 1.0   # DiceLoss(loss_weight=1.0)
DICE_EPS = 0.001
EPS = 1e-6
LANE = 128


# ----------------------------- tiling plan ---------------------------------

def _pick_s_tile(per_core, full_rows, cap):
    """Largest legal sublane tile dividing `per_core`: a multiple of 8, or the
    full (untiled) sublane extent of the array."""
    if per_core == full_rows and per_core <= cap:
        return per_core
    for s in range(min(cap, per_core), 7, -1):
        if per_core % s == 0 and s % 8 == 0:
            return s
    if per_core == full_rows:
        return per_core          # one big block covering the whole axis
    return None


def _plan_grid(rows, batch):
    """(n_cores, sublane_tile) for the flattened-spatial row axis."""
    # Budget ~2 MiB for the largest (2-channel f32) stream per step, cap at 256
    # sublane rows -> many thousand pixels per grid step, well inside v7x's
    # 64 MiB-per-core VMEM even with double-buffering of every stream.
    cap = (2 * 1024 * 1024) // (batch * LANE * 4 * 2)
    cap = max(8, min(256, cap - cap % 8))
    if rows % 2 == 0:                       # try a 2-way core split (v7x megacore)
        s = _pick_s_tile(rows // 2, rows, cap)
        if s is not None:
            return 2, s
    return 1, _pick_s_tile(rows, rows, cap)


def _nbytes(x):
    return math.prod(x.shape) * jnp.dtype(x.dtype).itemsize


# ----------------------------- plain-JAX glue -------------------------------

def _ohem_prepare(score, gt, tm):
    """Per-image OHEM threshold + use flag (ohem_single without the mask build)."""
    # TODO(synk): the OHEM top-k threshold needs a (partial) sort with a
    # data-dependent rank; no clean Pallas equivalent, kept in plain JAX.  A
    # histogram/quantile selection would cut the O(HW log HW) cost at 640x640.
    score = score.astype(jnp.float32)
    pos = gt > 0.5
    tm_pos = tm > 0.5
    pos_num = jnp.sum(pos) - jnp.sum(pos & jnp.logical_not(tm_pos))
    neg_mask = jnp.logical_not(pos) & tm_pos
    neg_count = jnp.sum(neg_mask)
    neg_num = jnp.minimum(pos_num * 3, neg_count)
    neg_scores = jnp.where(neg_mask, score, -jnp.inf)
    sorted_desc = -jnp.sort(-neg_scores)                      # descending
    idx = jnp.clip(neg_num - 1, 0, score.shape[0] - 1)
    threshold = sorted_desc[idx]                              # neg_num-th largest neg score
    use_ohem = jnp.logical_and(pos_num > 0, neg_num > 0)      # gates the -inf cases
    return threshold.astype(jnp.float32), use_ohem.astype(jnp.float32)


def _select_single(distance, gt_instance, gt_kernel_instance, training_mask):
    """SmoothL1Loss.select_single.  The coord parameter is the identity pixel
    grid, built for the actual (H, W) instead of the reference's 640x640
    buffer.  Like the reference, BOTH gather coordinates are clipped to W-1,
    so square maps (H == W) are assumed."""
    # TODO(synk): the data-dependent 2D gather at off_points has no clean
    # Pallas equivalent; done in plain JAX.
    _, H, W = distance.shape
    yy, xx = jnp.meshgrid(jnp.arange(H), jnp.arange(W), indexing="ij")
    coord_x = xx.reshape(-1).astype(jnp.float32)              # coord[:, 0] = j
    coord_y = yy.reshape(-1).astype(jnp.float32)              # coord[:, 1] = i
    select_distance = distance.astype(jnp.float32).reshape(2, -1)
    off_x = coord_x + 10.0 * select_distance[0]
    off_y = coord_y + 10.0 * select_distance[1]
    off_x = jnp.clip(off_x, 0, W - 1).astype(jnp.int32)
    off_y = jnp.clip(off_y, 0, W - 1).astype(jnp.int32)       # reference clips both to W-1
    gathered = gt_kernel_instance[off_y, off_x]
    sel = (gt_instance.reshape(-1) != gathered).reshape(H, W).astype(jnp.float32)
    return sel * training_mask.astype(jnp.float32)


# ----------------------------- Pallas kernel --------------------------------

def _make_ct_kernel(batch):
    def kernel(thr_ref, use_ref,                       # SMEM scalar-prefetch, (B,)
               kern_ref, gtk_ref, tm_ref, selm_ref,    # (B, S, 128) VMEM tiles
               dist_ref, gtd_ref,                      # (B, 2, S, 128) VMEM tiles
               a_acc, b_acc, c_acc, sl1_acc, m_acc):   # (B, 128) per-core accumulators
        t = pl.program_id(1)

        @pl.when(t == 0)
        def _init():
            a_acc[...] = jnp.zeros_like(a_acc)
            b_acc[...] = jnp.zeros_like(b_acc)
            c_acc[...] = jnp.zeros_like(c_acc)
            sl1_acc[...] = jnp.zeros_like(sl1_acc)
            m_acc[...] = jnp.zeros_like(m_acc)

        score = kern_ref[...].astype(jnp.float32)      # (B, S, L) raw kernel logits
        gt = gtk_ref[...].astype(jnp.float32)
        tm = tm_ref[...].astype(jnp.float32)
        sm = selm_ref[...].astype(jnp.float32)         # selected loc training mask
        d = dist_ref[...].astype(jnp.float32)          # (B, 2, S, L)
        gd = gtd_ref[...].astype(jnp.float32)

        # --- SmoothL1 partial sums: channel axis folded elementwise, sublane
        #     axis reduced; the 128-lane reduction is deferred to the wrapper.
        def smooth_l1(x, y):
            dd = jnp.abs(x - y) * sm
            return jnp.where(dd < BETA, 0.5 * dd * dd / BETA, dd - 0.5 * BETA)

        loc = smooth_l1(d[:, 0], gd[:, 0]) + smooth_l1(d[:, 1], gd[:, 1])  # (B,S,L)
        sl1_acc[...] += jnp.sum(loc, axis=1)                               # (B, L)
        m_acc[...] += jnp.sum(sm, axis=1)                                  # (B, L)

        # --- OHEM-masked Dice partial sums.  Per-image threshold / use flag are
        #     SMEM scalars; the OHEM mask is built in-register, never stored.
        sel_rows = []
        for i in range(batch):
            thr_i = thr_ref[i]
            use_i = use_ref[i]
            ohem = jnp.where(
                jnp.logical_and(jnp.logical_or(score[i] >= thr_i, gt[i] > 0.5),
                                tm[i] > 0.5),
                1.0, 0.0)
            sel_rows.append(tm[i] + use_i * (ohem - tm[i]))   # use ? ohem : training_mask
        sel = jnp.stack(sel_rows, axis=0)                     # (B, S, L)

        inp = jax.nn.sigmoid(score) * sel
        tgt = gt * sel
        a_acc[...] += jnp.sum(inp * tgt, axis=1)              # (B, L)
        b_acc[...] += jnp.sum(inp * inp, axis=1)
        c_acc[...] += jnp.sum(tgt * tgt, axis=1)

    return kernel


# ----------------------------- wrapper ---------------------------------------

@jax.jit
def ct_loss(out, gt_kernels, training_masks, gt_instances, gt_kernel_instances,
            training_mask_distances, gt_distances):
    B, C, H, W = out.shape
    assert C == 3, "maps must have 3 channels: 1 kernel + 2 distances"
    HW = H * W
    assert HW % LANE == 0, "H*W must be a multiple of 128"
    rows = HW // LANE

    kernels = out[:, 0]                                # (B, H, W) raw logits
    distances = out[:, 1:]                             # (B, 2, H, W)

    def lane32(x):
        # Keep 32-bit inputs in their native dtype (cast after load inside the
        # kernel, hidden under DMA); widen sub-32-bit inputs so the (8,128)
        # block tiling chosen below stays legal.
        # TODO(synk): true bf16/u8 passthrough would need 32-row sublane tiles.
        return x if jnp.dtype(x.dtype).itemsize == 4 else x.astype(jnp.float32)

    kf = lane32(kernels).reshape(B, rows, LANE)
    gf = lane32(gt_kernels).reshape(B, rows, LANE)
    tmf = lane32(training_masks).reshape(B, rows, LANE)
    df = lane32(distances).reshape(B, 2, rows, LANE)
    gdf = lane32(gt_distances).reshape(B, 2, rows, LANE)

    # Plain-JAX glue: OHEM threshold (sort) + gather-selected loc mask.
    thr, use = jax.vmap(_ohem_prepare)(
        kernels.reshape(B, HW), gt_kernels.reshape(B, HW),
        training_masks.reshape(B, HW))
    sel_tm = jax.vmap(_select_single)(
        distances, gt_instances, gt_kernel_instances, training_mask_distances)
    selmf = sel_tm.reshape(B, rows, LANE)              # float32

    ncores, s_tile = _plan_grid(rows, B)
    tiles_per_core = (rows // ncores) // s_tile
    grid = (ncores, tiles_per_core)

    def row_map(c, t, thr_ref, use_ref):
        return (0, c * tiles_per_core + t, 0)

    def dist_map(c, t, thr_ref, use_ref):
        return (0, 0, c * tiles_per_core + t, 0)

    def acc_map(c, t, thr_ref, use_ref):
        return (c, 0, 0)

    bt_spec = pl.BlockSpec((B, s_tile, LANE), row_map)
    dist_spec = pl.BlockSpec((B, 2, s_tile, LANE), dist_map)
    acc_spec = pl.BlockSpec((None, B, LANE), acc_map)   # core axis squeezed

    n_px = B * HW
    cost = pl.CostEstimate(
        flops=45 * n_px,
        transcendentals=n_px,                           # sigmoid
        bytes_accessed=int(sum(_nbytes(x) for x in (kf, gf, tmf, selmf, df, gdf))
                           + 5 * ncores * B * LANE * 4))

    outs = pl.pallas_call(
        _make_ct_kernel(B),
        out_shape=[jax.ShapeDtypeStruct((ncores, B, LANE), jnp.float32)] * 5,
        grid_spec=pltpu.PrefetchScalarGridSpec(
            num_scalar_prefetch=2,
            grid=grid,
            in_specs=[bt_spec, bt_spec, bt_spec, bt_spec, dist_spec, dist_spec],
            out_specs=[acc_spec] * 5,
        ),
        compiler_params=pltpu.CompilerParams(
            dimension_semantics=("parallel", "arbitrary")),
        cost_estimate=cost,
    )(thr, use, kf, gf, tmf, selmf, df, gdf)

    a, b, c, sl1, msum = [jnp.sum(o, axis=(0, 2)) for o in outs]   # (B,) each

    # DiceLoss (reduce=False): 1 - 2a / (b + 0.001 + c + 0.001)
    loss_kernel = DICE_LOSS_WEIGHT * (1.0 - 2.0 * a / (b + DICE_EPS + c + DICE_EPS))
    # SmoothL1 loc loss (reduce=False): weight * sum(loss) / (sum(mask) + eps)
    loss_loc = LOC_LOSS_WEIGHT * sl1 / (msum + EPS)

    return {"loss": loss_kernel + loss_loc}


if __name__ == "__main__":
    key = jax.random.PRNGKey(0)
    B, H, W = 2, 16, 16
    ks = jax.random.split(key, 7)

    out = jax.random.normal(ks[0], (B, 3, H, W), jnp.float32)                 # preds['maps']
    gt_kernels = (jax.random.uniform(ks[1], (B, H, W)) > 0.5).astype(jnp.float32)
    training_masks = (jax.random.uniform(ks[2], (B, H, W)) > 0.1).astype(jnp.float32)
    gt_instances = jax.random.randint(ks[3], (B, H, W), 0, 4, jnp.int32)
    gt_kernel_instances = jax.random.randint(ks[4], (B, H, W), 0, 4, jnp.int32)
    training_mask_distances = (jax.random.uniform(ks[5], (B, H, W)) > 0.1).astype(jnp.float32)
    gt_distances = jax.random.normal(ks[6], (B, 2, H, W), jnp.float32)

    losses = ct_loss(out, gt_kernels, training_masks, gt_instances,
                     gt_kernel_instances, training_mask_distances, gt_distances)
    jax.block_until_ready(losses["loss"])
    assert losses["loss"].shape == (B,)
    print("KERNEL_OK")
</pallas_src>

<mosaic_0001>
module attributes {stable_mosaic.version = 11 : i64} {
  func.func @kernel(%arg0: i32, %arg1: i32, %arg2: memref<2xf32, #tpu.memory_space<smem>>, %arg3: memref<2xf32, #tpu.memory_space<smem>>, %arg4: memref<2x2x128xf32, #tpu.memory_space<vmem>>, %arg5: memref<2x2x128xf32, #tpu.memory_space<vmem>>, %arg6: memref<2x2x128xf32, #tpu.memory_space<vmem>>, %arg7: memref<2x2x128xf32, #tpu.memory_space<vmem>>, %arg8: memref<2x2x2x128xf32, #tpu.memory_space<vmem>>, %arg9: memref<2x2x2x128xf32, #tpu.memory_space<vmem>>, %arg10: memref<1x2x128xf32, #tpu.memory_space<vmem>>, %arg11: memref<1x2x128xf32, #tpu.memory_space<vmem>>, %arg12: memref<1x2x128xf32, #tpu.memory_space<vmem>>, %arg13: memref<1x2x128xf32, #tpu.memory_space<vmem>>, %arg14: memref<1x2x128xf32, #tpu.memory_space<vmem>>) attributes {dimension_semantics = [#tpu.dimension_semantics<parallel>, #tpu.dimension_semantics<arbitrary>], iteration_bounds = array<i64: 1, 1>, scalar_prefetch = 2 : i64, scratch_operands = 0 : i64, tpu.core_type = #tpu.core_type<tc>, window_params = [{transform_indices = @transform_0, window_bounds = array<i64: 2, 2, 128>}, {transform_indices = @transform_1, window_bounds = array<i64: 2, 2, 128>}, {transform_indices = @transform_2, window_bounds = array<i64: 2, 2, 128>}, {transform_indices = @transform_3, window_bounds = array<i64: 2, 2, 128>}, {transform_indices = @transform_4, window_bounds = array<i64: 2, 2, 2, 128>}, {transform_indices = @transform_5, window_bounds = array<i64: 2, 2, 2, 128>}, {transform_indices = @transform_6, window_bounds = array<i64: 1, 2, 128>}, {transform_indices = @transform_7, window_bounds = array<i64: 1, 2, 128>}, {transform_indices = @transform_8, window_bounds = array<i64: 1, 2, 128>}, {transform_indices = @transform_9, window_bounds = array<i64: 1, 2, 128>}, {transform_indices = @transform_10, window_bounds = array<i64: 1, 2, 128>}]} {
    %c0_i32 = arith.constant 0 : i32
    %0 = arith.cmpi eq, %arg1, %c0_i32 : i32
    %1 = arith.extui %0 : i1 to i32
    %c0_i32_0 = arith.constant 0 : i32
    %2 = arith.cmpi ne, %1, %c0_i32_0 : i32
    scf.if %2 {
      %cst_74 = arith.constant 0.000000e+00 : f32
      %146 = vector.broadcast %cst_74 : f32 to vector<2x128xf32>
      %c0_75 = arith.constant 0 : index
      %c0_76 = arith.constant 0 : index
      %c0_77 = arith.constant 0 : index
      %147 = vector.load %arg10[%c0_75, %c0_76, %c0_77] : memref<1x2x128xf32, #tpu.memory_space<vmem>>, vector<1x2x128xf32>
      %148 = vector.shape_cast %147 : vector<1x2x128xf32> to vector<2x128xf32>
      %149 = vector.shape_cast %146 : vector<2x128xf32> to vector<1x2x128xf32>
      tpu.vector_store %arg10[%c0_75, %c0_76, %c0_77], %149 {strides = array<i32>} : memref<1x2x128xf32, #tpu.memory_space<vmem>>, vector<1x2x128xf32>,
      %cst_78 = arith.constant 0.000000e+00 : f32
      %150 = vector.broadcast %cst_78 : f32 to vector<2x128xf32>
      %c0_79 = arith.constant 0 : index
      %c0_80 = arith.constant 0 : index
      %c0_81 = arith.constant 0 : index
      %151 = vector.load %arg11[%c0_79, %c0_80, %c0_81] : memref<1x2x128xf32, #tpu.memory_space<vmem>>, vector<1x2x128xf32>
      %152 = vector.shape_cast %151 : vector<1x2x128xf32> to vector<2x128xf32>
      %153 = vector.shape_cast %150 : vector<2x128xf32> to vector<1x2x128xf32>
      tpu.vector_store %arg11[%c0_79, %c0_80, %c0_81], %153 {strides = array<i32>} : memref<1x2x128xf32, #tpu.memory_space<vmem>>, vector<1x2x128xf32>,
      %cst_82 = arith.constant 0.000000e+00 : f32
      %154 = vector.broadcast %cst_82 : f32 to vector<2x128xf32>
      %c0_83 = arith.constant 0 : index
      %c0_84 = arith.constant 0 : index
      %c0_85 = arith.constant 0 : index
      %155 = vector.load %arg12[%c0_83, %c0_84, %c0_85] : memref<1x2x128xf32, #tpu.memory_space<vmem>>, vector<1x2x128xf32>
      %156 = vector.shape_cast %155 : vector<1x2x128xf32> to vector<2x128xf32>
      %157 = vector.shape_cast %154 : vector<2x128xf32> to vector<1x2x128xf32>
      tpu.vector_store %arg12[%c0_83, %c0_84, %c0_85], %157 {strides = array<i32>} : memref<1x2x128xf32, #tpu.memory_space<vmem>>, vector<1x2x128xf32>,
      %cst_86 = arith.constant 0.000000e+00 : f32
      %158 = vector.broadcast %cst_86 : f32 to vector<2x128xf32>
      %c0_87 = arith.constant 0 : index
      %c0_88 = arith.constant 0 : index
      %c0_89 = arith.constant 0 : index
      %159 = vector.load %arg13[%c0_87, %c0_88, %c0_89] : memref<1x2x128xf32, #tpu.memory_space<vmem>>, vector<1x2x128xf32>
      %160 = vector.shape_cast %159 : vector<1x2x128xf32> to vector<2x128xf32>
      %161 = vector.shape_cast %158 : vector<2x128xf32> to vector<1x2x128xf32>
      tpu.vector_store %arg13[%c0_87, %c0_88, %c0_89], %161 {strides = array<i32>} : memref<1x2x128xf32, #tpu.memory_space<vmem>>, vector<1x2x128xf32>,
      %cst_90 = arith.constant 0.000000e+00 : f32
      %162 = vector.broadcast %cst_90 : f32 to vector<2x128xf32>
      %c0_91 = arith.constant 0 : index
      %c0_92 = arith.constant 0 : index
      %c0_93 = arith.constant 0 : index
      %163 = vector.load %arg14[%c0_91, %c0_92, %c0_93] : memref<1x2x128xf32, #tpu.memory_space<vmem>>, vector<1x2x128xf32>
      %164 = vector.shape_cast %163 : vector<1x2x128xf32> to vector<2x128xf32>
      %165 = vector.shape_cast %162 : vector<2x128xf32> to vector<1x2x128xf32>
      tpu.vector_store %arg14[%c0_91, %c0_92, %c0_93], %165 {strides = array<i32>} : memref<1x2x128xf32, #tpu.memory_space<vmem>>, vector<1x2x128xf32>,
    } else {
    }
    %c0 = arith.constant 0 : index
    %c0_1 = arith.constant 0 : index
    %c0_2 = arith.constant 0 : index
    %3 = vector.load %arg4[%c0, %c0_1, %c0_2] : memref<2x2x128xf32, #tpu.memory_space<vmem>>, vector<2x2x128xf32>
    %c0_3 = arith.constant 0 : index
    %c0_4 = arith.constant 0 : index
    %c0_5 = arith.constant 0 : index
    %4 = vector.load %arg5[%c0_3, %c0_4, %c0_5] : memref<2x2x128xf32, #tpu.memory_space<vmem>>, vector<2x2x128xf32>
    %c0_6 = arith.constant 0 : index
    %c0_7 = arith.constant 0 : index
    %c0_8 = arith.constant 0 : index
    %5 = vector.load %arg6[%c0_6, %c0_7, %c0_8] : memref<2x2x128xf32, #tpu.memory_space<vmem>>, vector<2x2x128xf32>
    %c0_9 = arith.constant 0 : index
    %c0_10 = arith.constant 0 : index
    %c0_11 = arith.constant 0 : index
    %6 = vector.load %arg7[%c0_9, %c0_10, %c0_11] : memref<2x2x128xf32, #tpu.memory_space<vmem>>, vector<2x2x128xf32>
    %c0_12 = arith.constant 0 : index
    %c0_13 = arith.constant 0 : index
    %c0_14 = arith.constant 0 : index
    %c0_15 = arith.constant 0 : index
    %7 = vector.load %arg8[%c0_12, %c0_13, %c0_14, %c0_15] : memref<2x2x2x128xf32, #tpu.memory_space<vmem>>, vector<2x2x2x128xf32>
    %c0_16 = arith.constant 0 : index
    %c0_17 = arith.constant 0 : index
    %c0_18 = arith.constant 0 : index
    %c0_19 = arith.constant 0 : index
    %8 = vector.load %arg9[%c0_16, %c0_17, %c0_18, %c0_19] : memref<2x2x2x128xf32, #tpu.memory_space<vmem>>, vector<2x2x2x128xf32>
    %9 = vector.extract_strided_slice %7 {offsets = [0, 0, 0, 0], sizes = [2, 1, 2, 128], strides = [1, 1, 1, 1]} : vector<2x2x2x128xf32> to vector<2x1x2x128xf32>
    %10 = vector.shape_cast %9 : vector<2x1x2x128xf32> to vector<2x2x128xf32>
    %11 = vector.extract_strided_slice %8 {offsets = [0, 0, 0, 0], sizes = [2, 1, 2, 128], strides = [1, 1, 1, 1]} : vector<2x2x2x128xf32> to vector<2x1x2x128xf32>
    %12 = vector.shape_cast %11 : vector<2x1x2x128xf32> to vector<2x2x128xf32>
    %13 = arith.subf %10, %12 : vector<2x2x128xf32>
    %14 = math.absf %13 : vector<2x2x128xf32>
    %15 = arith.mulf %14, %6 : vector<2x2x128xf32>
    %cst = arith.constant 1.000000e-01 : f32
    %16 = vector.broadcast %cst : f32 to vector<2x2x128xf32>
    %17 = arith.cmpf olt, %15, %16 : vector<2x2x128xf32>
    %cst_20 = arith.constant 5.000000e-01 : f32
    %18 = vector.broadcast %cst_20 : f32 to vector<2x2x128xf32>
    %19 = arith.mulf %18, %15 : vector<2x2x128xf32>
    %20 = arith.mulf %19, %15 : vector<2x2x128xf32>
    %cst_21 = arith.constant 1.000000e-01 : f32
    %21 = vector.broadcast %cst_21 : f32 to vector<2x2x128xf32>
    %22 = arith.divf %20, %21 : vector<2x2x128xf32>
    %cst_22 = arith.constant 5.000000e-02 : f32
    %23 = vector.broadcast %cst_22 : f32 to vector<2x2x128xf32>
    %24 = arith.subf %15, %23 : vector<2x2x128xf32>
    %25 = arith.select %17, %22, %24 : vector<2x2x128xi1>, vector<2x2x128xf32>
    %26 = vector.extract_strided_slice %7 {offsets = [0, 1, 0, 0], sizes = [2, 1, 2, 128], strides = [1, 1, 1, 1]} : vector<2x2x2x128xf32> to vector<2x1x2x128xf32>
    %27 = vector.shape_cast %26 : vector<2x1x2x128xf32> to vector<2x2x128xf32>
    %28 = vector.extract_strided_slice %8 {offsets = [0, 1, 0, 0], sizes = [2, 1, 2, 128], strides = [1, 1, 1, 1]} : vector<2x2x2x128xf32> to vector<2x1x2x128xf32>
    %29 = vector.shape_cast %28 : vector<2x1x2x128xf32> to vector<2x2x128xf32>
    %30 = arith.subf %27, %29 : vector<2x2x128xf32>
    %31 = math.absf %30 : vector<2x2x128xf32>
    %32 = arith.mulf %31, %6 : vector<2x2x128xf32>
    %cst_23 = arith.constant 1.000000e-01 : f32
    %33 = vector.broadcast %cst_23 : f32 to vector<2x2x128xf32>
    %34 = arith.cmpf olt, %32, %33 : vector<2x2x128xf32>
    %cst_24 = arith.constant 5.000000e-01 : f32
    %35 = vector.broadcast %cst_24 : f32 to vector<2x2x128xf32>
    %36 = arith.mulf %35, %32 : vector<2x2x128xf32>
    %37 = arith.mulf %36, %32 : vector<2x2x128xf32>
    %cst_25 = arith.constant 1.000000e-01 : f32
    %38 = vector.broadcast %cst_25 : f32 to vector<2x2x128xf32>
    %39 = arith.divf %37, %38 : vector<2x2x128xf32>
    %cst_26 = arith.constant 5.000000e-02 : f32
    %40 = vector.broadcast %cst_26 : f32 to vector<2x2x128xf32>
    %41 = arith.subf %32, %40 : vector<2x2x128xf32>
    %42 = arith.select %34, %39, %41 : vector<2x2x128xi1>, vector<2x2x128xf32>
    %43 = arith.addf %25, %42 : vector<2x2x128xf32>
    %c0_27 = arith.constant 0 : index
    %c0_28 = arith.constant 0 : index
    %c0_29 = arith.constant 0 : index
    %44 = vector.load %arg13[%c0_27, %c0_28, %c0_29] : memref<1x2x128xf32, #tpu.memory_space<vmem>>, vector<1x2x128xf32>
    %45 = vector.shape_cast %44 : vector<1x2x128xf32> to vector<2x128xf32>
    %cst_30 = arith.constant dense<0.000000e+00> : vector<2x128xf32>
    %46 = vector.multi_reduction <add>, %43, %cst_30 [1] : vector<2x2x128xf32> to vector<2x128xf32>
    %47 = arith.addf %45, %46 : vector<2x128xf32>
    %c0_31 = arith.constant 0 : index
    %c0_32 = arith.constant 0 : index
    %c0_33 = arith.constant 0 : index
    %48 = vector.load %arg13[%c0_31, %c0_32, %c0_33] : memref<1x2x128xf32, #tpu.memory_space<vmem>>, vector<1x2x128xf32>
    %49 = vector.shape_cast %48 : vector<1x2x128xf32> to vector<2x128xf32>
    %50 = vector.shape_cast %47 : vector<2x128xf32> to vector<1x2x128xf32>
    tpu.vector_store %arg13[%c0_31, %c0_32, %c0_33], %50 {strides = array<i32>} : memref<1x2x128xf32, #tpu.memory_space<vmem>>, vector<1x2x128xf32>,
    %c0_34 = arith.constant 0 : index
    %c0_35 = arith.constant 0 : index
    %c0_36 = arith.constant 0 : index
    %51 = vector.load %arg14[%c0_34, %c0_35, %c0_36] : memref<1x2x128xf32, #tpu.memory_space<vmem>>, vector<1x2x128xf32>
    %52 = vector.shape_cast %51 : vector<1x2x128xf32> to vector<2x128xf32>
    %cst_37 = arith.constant dense<0.000000e+00> : vector<2x128xf32>
    %53 = vector.multi_reduction <add>, %6, %cst_37 [1] : vector<2x2x128xf32> to vector<2x128xf32>
    %54 = arith.addf %52, %53 : vector<2x128xf32>
    %c0_38 = arith.constant 0 : index
    %c0_39 = arith.constant 0 : index
    %c0_40 = arith.constant 0 : index
    %55 = vector.load %arg14[%c0_38, %c0_39, %c0_40] : memref<1x2x128xf32, #tpu.memory_space<vmem>>, vector<1x2x128xf32>
    %56 = vector.shape_cast %55 : vector<1x2x128xf32> to vector<2x128xf32>
    %57 = vector.shape_cast %54 : vector<2x128xf32> to vector<1x2x128xf32>
    tpu.vector_store %arg14[%c0_38, %c0_39, %c0_40], %57 {strides = array<i32>} : memref<1x2x128xf32, #tpu.memory_space<vmem>>, vector<1x2x128xf32>,
    %c0_41 = arith.constant 0 : index
    %58 = memref.load %arg2[%c0_41] : memref<2xf32, #tpu.memory_space<smem>>
    %c0_42 = arith.constant 0 : index
    %59 = memref.load %arg3[%c0_42] : memref<2xf32, #tpu.memory_space<smem>>
    %60 = vector.extract_strided_slice %3 {offsets = [0, 0, 0], sizes = [1, 2, 128], strides = [1, 1, 1]} : vector<2x2x128xf32> to vector<1x2x128xf32>
    %61 = vector.shape_cast %60 : vector<1x2x128xf32> to vector<2x128xf32>
    %62 = vector.broadcast %58 : f32 to vector<2x128xf32>
    %63 = arith.cmpf oge, %61, %62 : vector<2x128xf32>
    %64 = vector.extract_strided_slice %4 {offsets = [0, 0, 0], sizes = [1, 2, 128], strides = [1, 1, 1]} : vector<2x2x128xf32> to vector<1x2x128xf32>
    %65 = vector.shape_cast %64 : vector<1x2x128xf32> to vector<2x128xf32>
    %cst_43 = arith.constant 5.000000e-01 : f32
    %66 = vector.broadcast %cst_43 : f32 to vector<2x128xf32>
    %67 = arith.cmpf ogt, %65, %66 : vector<2x128xf32>
    %68 = arith.ori %63, %67 : vector<2x128xi1>
    %69 = vector.extract_strided_slice %5 {offsets = [0, 0, 0], sizes = [1, 2, 128], strides = [1, 1, 1]} : vector<2x2x128xf32> to vector<1x2x128xf32>
    %70 = vector.shape_cast %69 : vector<1x2x128xf32> to vector<2x128xf32>
    %cst_44 = arith.constant 5.000000e-01 : f32
    %71 = vector.broadcast %cst_44 : f32 to vector<2x128xf32>
    %72 = arith.cmpf ogt, %70, %71 : vector<2x128xf32>
    %73 = arith.andi %68, %72 : vector<2x128xi1>
    %cst_45 = arith.constant 1.000000e+00 : f32
    %cst_46 = arith.constant 0.000000e+00 : f32
    %74 = vector.broadcast %cst_45 : f32 to vector<2x128xf32>
    %75 = vector.broadcast %cst_46 : f32 to vector<2x128xf32>
    %76 = arith.select %73, %74, %75 : vector<2x128xi1>, vector<2x128xf32>
    %77 = vector.extract_strided_slice %5 {offsets = [0, 0, 0], sizes = [1, 2, 128], strides = [1, 1, 1]} : vector<2x2x128xf32> to vector<1x2x128xf32>
    %78 = vector.shape_cast %77 : vector<1x2x128xf32> to vector<2x128xf32>
    %79 = vector.extract_strided_slice %5 {offsets = [0, 0, 0], sizes = [1, 2, 128], strides = [1, 1, 1]} : vector<2x2x128xf32> to vector<1x2x128xf32>
    %80 = vector.shape_cast %79 : vector<1x2x128xf32> to vector<2x128xf32>
    %81 = arith.subf %76, %80 : vector<2x128xf32>
    %82 = vector.broadcast %59 : f32 to vector<2x128xf32>
    %83 = arith.mulf %82, %81 : vector<2x128xf32>
    %84 = arith.addf %78, %83 : vector<2x128xf32>
    %c1 = arith.constant 1 : index
    %85 = memref.load %arg2[%c1] : memref<2xf32, #tpu.memory_space<smem>>
    %c1_47 = arith.constant 1 : index
    %86 = memref.load %arg3[%c1_47] : memref<2xf32, #tpu.memory_space<smem>>
    %87 = vector.extract_strided_slice %3 {offsets = [1, 0, 0], sizes = [1, 2, 128], strides = [1, 1, 1]} : vector<2x2x128xf32> to vector<1x2x128xf32>
    %88 = vector.shape_cast %87 : vector<1x2x128xf32> to vector<2x128xf32>
    %89 = vector.broadcast %85 : f32 to vector<2x128xf32>
    %90 = arith.cmpf oge, %88, %89 : vector<2x128xf32>
    %91 = vector.extract_strided_slice %4 {offsets = [1, 0, 0], sizes = [1, 2, 128], strides = [1, 1, 1]} : vector<2x2x128xf32> to vector<1x2x128xf32>
    %92 = vector.shape_cast %91 : vector<1x2x128xf32> to vector<2x128xf32>
    %cst_48 = arith.constant 5.000000e-01 : f32
    %93 = vector.broadcast %cst_48 : f32 to vector<2x128xf32>
    %94 = arith.cmpf ogt, %92, %93 : vector<2x128xf32>
    %95 = arith.ori %90, %94 : vector<2x128xi1>
    %96 = vector.extract_strided_slice %5 {offsets = [1, 0, 0], sizes = [1, 2, 128], strides = [1, 1, 1]} : vector<2x2x128xf32> to vector<1x2x128xf32>
    %97 = vector.shape_cast %96 : vector<1x2x128xf32> to vector<2x128xf32>
    %cst_49 = arith.constant 5.000000e-01 : f32
    %98 = vector.broadcast %cst_49 : f32 to vector<2x128xf32>
    %99 = arith.cmpf ogt, %97, %98 : vector<2x128xf32>
    %100 = arith.andi %95, %99 : vector<2x128xi1>
    %cst_50 = arith.constant 1.000000e+00 : f32
    %cst_51 = arith.constant 0.000000e+00 : f32
    %101 = vector.broadcast %cst_50 : f32 to vector<2x128xf32>
    %102 = vector.broadcast %cst_51 : f32 to vector<2x128xf32>
    %103 = arith.select %100, %101, %102 : vector<2x128xi1>, vector<2x128xf32>
    %104 = vector.extract_strided_slice %5 {offsets = [1, 0, 0], sizes = [1, 2, 128], strides = [1, 1, 1]} : vector<2x2x128xf32> to vector<1x2x128xf32>
    %105 = vector.shape_cast %104 : vector<1x2x128xf32> to vector<2x128xf32>
    %106 = vector.extract_strided_slice %5 {offsets = [1, 0, 0], sizes = [1, 2, 128], strides = [1, 1, 1]} : vector<2x2x128xf32> to vector<1x2x128xf32>
    %107 = vector.shape_cast %106 : vector<1x2x128xf32> to vector<2x128xf32>
    %108 = arith.subf %103, %107 : vector<2x128xf32>
    %109 = vector.broadcast %86 : f32 to vector<2x128xf32>
    %110 = arith.mulf %109, %108 : vector<2x128xf32>
    %111 = arith.addf %105, %110 : vector<2x128xf32>
    %112 = vector.shape_cast %84 : vector<2x128xf32> to vector<1x2x128xf32>
    %113 = vector.shape_cast %111 : vector<2x128xf32> to vector<1x2x128xf32>
    %114 = tpu.concatenate %112, %113 in 0 : vector<1x2x128xf32>, vector<1x2x128xf32> -> vector<2x2x128xf32>
    %115 = arith.negf %3 : vector<2x2x128xf32>
    %116 = math.exp %115 : vector<2x2x128xf32>
    %cst_52 = arith.constant 1.000000e+00 : f32
    %117 = vector.broadcast %cst_52 : f32 to vector<2x2x128xf32>
    %118 = arith.addf %117, %116 : vector<2x2x128xf32>
    %119 = arith.divf %117, %118 : vector<2x2x128xf32>
    %120 = arith.mulf %119, %114 : vector<2x2x128xf32>
    %121 = arith.mulf %4, %114 : vector<2x2x128xf32>
    %c0_53 = arith.constant 0 : index
    %c0_54 = arith.constant 0 : index
    %c0_55 = arith.constant 0 : index
    %122 = vector.load %arg10[%c0_53, %c0_54, %c0_55] : memref<1x2x128xf32, #tpu.memory_space<vmem>>, vector<1x2x128xf32>
    %123 = vector.shape_cast %122 : vector<1x2x128xf32> to vector<2x128xf32>
    %124 = arith.mulf %120, %121 : vector<2x2x128xf32>
    %cst_56 = arith.constant dense<0.000000e+00> : vector<2x128xf32>
    %125 = vector.multi_reduction <add>, %124, %cst_56 [1] : vector<2x2x128xf32> to vector<2x128xf32>
    %126 = arith.addf %123, %125 : vector<2x128xf32>
    %c0_57 = arith.constant 0 : index
    %c0_58 = arith.constant 0 : index
    %c0_59 = arith.constant 0 : index
    %127 = vector.load %arg10[%c0_57, %c0_58, %c0_59] : memref<1x2x128xf32, #tpu.memory_space<vmem>>, vector<1x2x128xf32>
    %128 = vector.shape_cast %127 : vector<1x2x128xf32> to vector<2x128xf32>
    %129 = vector.shape_cast %126 : vector<2x128xf32> to vector<1x2x128xf32>
    tpu.vector_store %arg10[%c0_57, %c0_58, %c0_59], %129 {strides = array<i32>} : memref<1x2x128xf32, #tpu.memory_space<vmem>>, vector<1x2x128xf32>,
    %c0_60 = arith.constant 0 : index
    %c0_61 = arith.constant 0 : index
    %c0_62 = arith.constant 0 : index
    %130 = vector.load %arg11[%c0_60, %c0_61, %c0_62] : memref<1x2x128xf32, #tpu.memory_space<vmem>>, vector<1x2x128xf32>
    %131 = vector.shape_cast %130 : vector<1x2x128xf32> to vector<2x128xf32>
    %132 = arith.mulf %120, %120 : vector<2x2x128xf32>
    %cst_63 = arith.constant dense<0.000000e+00> : vector<2x128xf32>
    %133 = vector.multi_reduction <add>, %132, %cst_63 [1] : vector<2x2x128xf32> to vector<2x128xf32>
    %134 = arith.addf %131, %133 : vector<2x128xf32>
    %c0_64 = arith.constant 0 : index
    %c0_65 = arith.constant 0 : index
    %c0_66 = arith.constant 0 : index
    %135 = vector.load %arg11[%c0_64, %c0_65, %c0_66] : memref<1x2x128xf32, #tpu.memory_space<vmem>>, vector<1x2x128xf32>
    %136 = vector.shape_cast %135 : vector<1x2x128xf32> to vector<2x128xf32>
    %137 = vector.shape_cast %134 : vector<2x128xf32> to vector<1x2x128xf32>
    tpu.vector_store %arg11[%c0_64, %c0_65, %c0_66], %137 {strides = array<i32>} : memref<1x2x128xf32, #tpu.memory_space<vmem>>, vector<1x2x128xf32>,
    %c0_67 = arith.constant 0 : index
    %c0_68 = arith.constant 0 : index
    %c0_69 = arith.constant 0 : index
    %138 = vector.load %arg12[%c0_67, %c0_68, %c0_69] : memref<1x2x128xf32, #tpu.memory_space<vmem>>, vector<1x2x128xf32>
    %139 = vector.shape_cast %138 : vector<1x2x128xf32> to vector<2x128xf32>
    %140 = arith.mulf %121, %121 : vector<2x2x128xf32>
    %cst_70 = arith.constant dense<0.000000e+00> : vector<2x128xf32>
    %141 = vector.multi_reduction <add>, %140, %cst_70 [1] : vector<2x2x128xf32> to vector<2x128xf32>
    %142 = arith.addf %139, %141 : vector<2x128xf32>
    %c0_71 = arith.constant 0 : index
    %c0_72 = arith.constant 0 : index
    %c0_73 = arith.constant 0 : index
    %143 = vector.load %arg12[%c0_71, %c0_72, %c0_73] : memref<1x2x128xf32, #tpu.memory_space<vmem>>, vector<1x2x128xf32>
    %144 = vector.shape_cast %143 : vector<1x2x128xf32> to vector<2x128xf32>
    %145 = vector.shape_cast %142 : vector<2x128xf32> to vector<1x2x128xf32>
    tpu.vector_store %arg12[%c0_71, %c0_72, %c0_73], %145 {strides = array<i32>} : memref<1x2x128xf32, #tpu.memory_space<vmem>>, vector<1x2x128xf32>,
    return
  }
  func.func @transform_0(%arg0: i32, %arg1: i32, %arg2: memref<2xf32, #tpu.memory_space<smem>>, %arg3: memref<2xf32, #tpu.memory_space<smem>>) -> (i32, i32, i32) {
    %c1_i32 = arith.constant 1 : i32
    %0 = arith.muli %arg0, %c1_i32 : i32
    %1 = arith.addi %0, %arg1 : i32
    %c0_i32 = arith.constant 0 : i32
    %c0_i32_0 = arith.constant 0 : i32
    %c0_i32_1 = arith.constant 0 : i32
    return %c0_i32, %1, %c0_i32_0 : i32, i32, i32
  }
  func.func @transform_1(%arg0: i32, %arg1: i32, %arg2: memref<2xf32, #tpu.memory_space<smem>>, %arg3: memref<2xf32, #tpu.memory_space<smem>>) -> (i32, i32, i32) {
    %c1_i32 = arith.constant 1 : i32
    %0 = arith.muli %arg0, %c1_i32 : i32
    %1 = arith.addi %0, %arg1 : i32
    %c0_i32 = arith.constant 0 : i32
    %c0_i32_0 = arith.constant 0 : i32
    %c0_i32_1 = arith.constant 0 : i32
    return %c0_i32, %1, %c0_i32_0 : i32, i32, i32
  }
  func.func @transform_2(%arg0: i32, %arg1: i32, %arg2: memref<2xf32, #tpu.memory_space<smem>>, %arg3: memref<2xf32, #tpu.memory_space<smem>>) -> (i32, i32, i32) {
    %c1_i32 = arith.constant 1 : i32
    %0 = arith.muli %arg0, %c1_i32 : i32
    %1 = arith.addi %0, %arg1 : i32
    %c0_i32 = arith.constant 0 : i32
    %c0_i32_0 = arith.constant 0 : i32
    %c0_i32_1 = arith.constant 0 : i32
    return %c0_i32, %1, %c0_i32_0 : i32, i32, i32
  }
  func.func @transform_3(%arg0: i32, %arg1: i32, %arg2: memref<2xf32, #tpu.memory_space<smem>>, %arg3: memref<2xf32, #tpu.memory_space<smem>>) -> (i32, i32, i32) {
    %c1_i32 = arith.constant 1 : i32
    %0 = arith.muli %arg0, %c1_i32 : i32
    %1 = arith.addi %0, %arg1 : i32
    %c0_i32 = arith.constant 0 : i32
    %c0_i32_0 = arith.constant 0 : i32
    %c0_i32_1 = arith.constant 0 : i32
    return %c0_i32, %1, %c0_i32_0 : i32, i32, i32
  }
  func.func @transform_4(%arg0: i32, %arg1: i32, %arg2: memref<2xf32, #tpu.memory_space<smem>>, %arg3: memref<2xf32, #tpu.memory_space<smem>>) -> (i32, i32, i32, i32) {
    %c1_i32 = arith.constant 1 : i32
    %0 = arith.muli %arg0, %c1_i32 : i32
    %1 = arith.addi %0, %arg1 : i32
    %c0_i32 = arith.constant 0 : i32
    %c0_i32_0 = arith.constant 0 : i32
    %c0_i32_1 = arith.constant 0 : i32
    %c0_i32_2 = arith.constant 0 : i32
    return %c0_i32, %c0_i32_0, %1, %c0_i32_1 : i32, i32, i32, i32
  }
  func.func @transform_5(%arg0: i32, %arg1: i32, %arg2: memref<2xf32, #tpu.memory_space<smem>>, %arg3: memref<2xf32, #tpu.memory_space<smem>>) -> (i32, i32, i32, i32) {
    %c1_i32 = arith.constant 1 : i32
    %0 = arith.muli %arg0, %c1_i32 : i32
    %1 = arith.addi %0, %arg1 : i32
    %c0_i32 = arith.constant 0 : i32
    %c0_i32_0 = arith.constant 0 : i32
    %c0_i32_1 = arith.constant 0 : i32
    %c0_i32_2 = arith.constant 0 : i32
    return %c0_i32, %c0_i32_0, %1, %c0_i32_1 : i32, i32, i32, i32
  }
  func.func @transform_6(%arg0: i32, %arg1: i32, %arg2: memref<2xf32, #tpu.memory_space<smem>>, %arg3: memref<2xf32, #tpu.memory_space<smem>>) -> (i32, i32, i32) {
    %c0_i32 = arith.constant 0 : i32
    %c0_i32_0 = arith.constant 0 : i32
    %c0_i32_1 = arith.constant 0 : i32
    return %arg0, %c0_i32, %c0_i32_0 : i32, i32, i32
  }
  func.func @transform_7(%arg0: i32, %arg1: i32, %arg2: memref<2xf32, #tpu.memory_space<smem>>, %arg3: memref<2xf32, #tpu.memory_space<smem>>) -> (i32, i32, i32) {
    %c0_i32 = arith.constant 0 : i32
    %c0_i32_0 = arith.constant 0 : i32
    %c0_i32_1 = arith.constant 0 : i32
    return %arg0, %c0_i32, %c0_i32_0 : i32, i32, i32
  }
  func.func @transform_8(%arg0: i32, %arg1: i32, %arg2: memref<2xf32, #tpu.memory_space<smem>>, %arg3: memref<2xf32, #tpu.memory_space<smem>>) -> (i32, i32, i32) {
    %c0_i32 = arith.constant 0 : i32
    %c0_i32_0 = arith.constant 0 : i32
    %c0_i32_1 = arith.constant 0 : i32
    return %arg0, %c0_i32, %c0_i32_0 : i32, i32, i32
  }
  func.func @transform_9(%arg0: i32, %arg1: i32, %arg2: memref<2xf32, #tpu.memory_space<smem>>, %arg3: memref<2xf32, #tpu.memory_space<smem>>) -> (i32, i32, i32) {
    %c0_i32 = arith.constant 0 : i32
    %c0_i32_0 = arith.constant 0 : i32
    %c0_i32_1 = arith.constant 0 : i32
    return %arg0, %c0_i32, %c0_i32_0 : i32, i32, i32
  }
  func.func @transform_10(%arg0: i32, %arg1: i32, %arg2: memref<2xf32, #tpu.memory_space<smem>>, %arg3: memref<2xf32, #tpu.memory_space<smem>>) -> (i32, i32, i32) {
    %c0_i32 = arith.constant 0 : i32
    %c0_i32_0 = arith.constant 0 : i32
    %c0_i32_1 = arith.constant 0 : i32
    return %arg0, %c0_i32, %c0_i32_0 : i32, i32, i32
  }
}

</mosaic_0001>

<llo_original>
// kernel: squeeze.5
$region0: #{squeeze.5}
  %s0 = inlined_call_operand.vmem [shape: f32[2,1,16,16], index: 0, kind: input, shape index: {}]
  %s1 = inlined_call_operand.vmem [shape: f32[2,2,128], index: 1, kind: output, shape index: {}]
  $region1: #{squeeze.5} parent=0
    #allocation0 [shape = 'u8[8192]{0}', space=vmem, size = 0x2000, scoped, tag = 'scoped mem for output reshape']
    %v2 = vld [vmem:[%s0] ss:$8 sm:$0xf]
    %vm3 = vcmask 130048
    %4 = vst.msk [vmem:[#allocation0] sm:$0x3] %vm3, %v2
    %s5 = scalar_lea.vmem [#allocation0], 6
    %6 = vst.msk [vmem:[%s5] sm:$0xc] %vm3, %v2
    %s7 = scalar_lea.vmem %s0, 7
    %v8 = vld [vmem:[%s7] ss:$8 sm:$0xf]
    %9 = vrot.lane.b32.xlu0 %v8, 112
    %v10 = vpop.permute.xlu0 %9
    %vm11 = vcmask 1048448
    %12 = vst.msk [vmem:[#allocation0] sm:$0x3] %vm11, %v10
    %s13 = scalar_lea.vmem [#allocation0], 6
    %14 = vst.msk [vmem:[%s13] sm:$0xc] %vm11, %v10
    %s15 = scalar_lea.vmem %s0, 6
    %v16 = vld [vmem:[%s15] ss:$8 sm:$0xf]
    %17 = vrot.lane.b32.xlu0 %v16, 96
    %v18 = vpop.permute.xlu0 %17
    %vm19 = vcmask 917248
    %20 = vst.msk [vmem:[#allocation0] sm:$0x3] %vm19, %v18
    %s21 = scalar_lea.vmem [#allocation0], 6
    %22 = vst.msk [vmem:[%s21] sm:$0xc] %vm19, %v18
    %s23 = scalar_lea.vmem %s0, 5
    %v24 = vld [vmem:[%s23] ss:$8 sm:$0xf]
    %25 = vrot.lane.b32.xlu0 %v24, 80
    %v26 = vpop.permute.xlu0 %25
    %vm27 = vcmask 786048
    %28 = vst.msk [vmem:[#allocation0] sm:$0x3] %vm27, %v26
    %s29 = scalar_lea.vmem [#allocation0], 6
    %30 = vst.msk [vmem:[%s29] sm:$0xc] %vm27, %v26
    %s31 = scalar_lea.vmem %s0, 4
    %v32 = vld [vmem:[%s31] ss:$8 sm:$0xf]
    %33 = vrot.lane.b32.xlu0 %v32, 64
    %v34 = vpop.permute.xlu0 %33
    %vm35 = vcmask 654848
    %36 = vst.msk [vmem:[#allocation0] sm:$0x3] %vm35, %v34
    %s37 = scalar_lea.vmem [#allocation0], 6
    %38 = vst.msk [vmem:[%s37] sm:$0xc] %vm35, %v34
    %s39 = scalar_lea.vmem %s0, 3
    %v40 = vld [vmem:[%s39] ss:$8 sm:$0xf]
    %41 = vrot.lane.b32.xlu0 %v40, 48
    %v42 = vpop.permute.xlu0 %41
    %vm43 = vcmask 523648
    %44 = vst.msk [vmem:[#allocation0] sm:$0x3] %vm43, %v42
    %s45 = scalar_lea.vmem [#allocation0], 6
    %46 = vst.msk [vmem:[%s45] sm:$0xc] %vm43, %v42
    %s47 = scalar_lea.vmem %s0, 2
    %v48 = vld [vmem:[%s47] ss:$8 sm:$0xf]
    %49 = vrot.lane.b32.xlu0 %v48, 32
    %v50 = vpop.permute.xlu0 %49
    %vm51 = vcmask 392448
    %52 = vst.msk [vmem:[#allocation0] sm:$0x3] %vm51, %v50
    %s53 = scalar_lea.vmem [#allocation0], 6
    %54 = vst.msk [vmem:[%s53] sm:$0xc] %vm51, %v50
    %s55 = scalar_lea.vmem %s0, 1
    %v56 = vld [vmem:[%s55] ss:$8 sm:$0xf]
    %57 = vrot.lane.b32.xlu0 %v56, 16
    %v58 = vpop.permute.xlu0 %57
    %vm59 = vcmask 261248
    %60 = vst.msk [vmem:[#allocation0] sm:$0x3] %vm59, %v58
    %s61 = scalar_lea.vmem [#allocation0], 6
    %62 = vst.msk [vmem:[%s61] sm:$0xc] %vm59, %v58
    %s64 = sshllo.u32 0, 2
    %v66 = vld [vmem:[#allocation0] sm:%s64]
    %s67 = sshllo.u32 0, 2
    %68 = vst [vmem:[%s1] sm:%s67] %v66
    %s69 = scalar_lea.vmem [#allocation0], 8
    %v70 = vld [vmem:[%s69] sm:%s64]
    %s71 = sshllo.u32 0, 2
    %s72 = scalar_lea.vmem %s1, 2
    %73 = vst [vmem:[%s72] sm:%s71] %v70

// kernel: squeeze.6
$region0: #{squeeze.6}
  %s0 = inlined_call_operand.vmem [shape: f32[2,1,16,16], index: 0, kind: input, shape index: {}]
  %s1 = inlined_call_operand.vmem [shape: f32[2,256], index: 1, kind: output, shape index: {}]
  $region1: #{squeeze.6} parent=0
    #allocation0 [shape = 'u8[8192]{0}', space=vmem, size = 0x2000, scoped, tag = 'scoped mem for output reshape']
    %v2 = vld [vmem:[%s0] ss:$8 sm:$0xf]
    %vm3 = vcmask 130048
    %4 = vst.msk [vmem:[#allocation0] ss:$8 sm:$0x3] %vm3, %v2
    %s5 = scalar_lea.vmem [#allocation0], 4294967281
    %6 = vst.msk [vmem:[%s5] ss:$8 sm:$0xc] %vm3, %v2
    %s7 = scalar_lea.vmem %s0, 7
    %s8 = smov 3
    %v9 = vld [vmem:[%s7] ss:$16 sm:%s8]
    %s10 = scalar_lea.vmem %s0, 4294967279
    %s11 = smov 12
    %v12 = vld [vmem:[%s10] ss:$16 sm:%s11]
    %vm13 = vcmask 1043458
    %v14 = vsel %vm13, %v12, %v9
    %15 = vrot.lane.b32.xlu0 %v14, 112
    %v16 = vpop.permute.xlu0 %15
    %vm17 = vcmask 1048448
    %18 = vst.msk [vmem:[#allocation0] sm:$0x3] %vm17, %v16
    %s19 = scalar_lea.vmem [#allocation0], 6
    %20 = vst.msk [vmem:[%s19] sm:$0xc] %vm17, %v16
    %s21 = scalar_lea.vmem %s0, 6
    %s22 = smov 3
    %v23 = vld [vmem:[%s21] ss:$16 sm:%s22]
    %s24 = scalar_lea.vmem %s0, 4294967278
    %s25 = smov 12
    %v26 = vld [vmem:[%s24] ss:$16 sm:%s25]
    %vm27 = vcmask 1043458
    %v28 = vsel %vm27, %v26, %v23
    %29 = vrot.lane.b32.xlu0 %v28, 96
    %v30 = vpop.permute.xlu0 %29
    %vm31 = vcmask 917248
    %32 = vst.msk [vmem:[#allocation0] sm:$0x3] %vm31, %v30
    %s33 = scalar_lea.vmem [#allocation0], 6
    %34 = vst.msk [vmem:[%s33] sm:$0xc] %vm31, %v30
    %s35 = scalar_lea.vmem %s0, 5
    %s36 = smov 3
    %v37 = vld [vmem:[%s35] ss:$16 sm:%s36]
    %s38 = scalar_lea.vmem %s0, 4294967277
    %s39 = smov 12
    %v40 = vld [vmem:[%s38] ss:$16 sm:%s39]
    %vm41 = vcmask 1043458
    %v42 = vsel %vm41, %v40, %v37
    %43 = vrot.lane.b32.xlu0 %v42, 80
    %v44 = vpop.permute.xlu0 %43
    %vm45 = vcmask 786048
    %46 = vst.msk [vmem:[#allocation0] sm:$0x3] %vm45, %v44
    %s47 = scalar_lea.vmem [#allocation0], 6
    %48 = vst.msk [vmem:[%s47] sm:$0xc] %vm45, %v44
    %s49 = scalar_lea.vmem %s0, 4
    %s50 = smov 3
    %v51 = vld [vmem:[%s49] ss:$16 sm:%s50]
    %s52 = scalar_lea.vmem %s0, 4294967276
    %s53 = smov 12
    %v54 = vld [vmem:[%s52] ss:$16 sm:%s53]
    %vm55 = vcmask 1043458
    %v56 = vsel %vm55, %v54, %v51
    %57 = vrot.lane.b32.xlu0 %v56, 64
    %v58 = vpop.permute.xlu0 %57
    %vm59 = vcmask 654848
    %60 = vst.msk [vmem:[#allocation0] sm:$0x3] %vm59, %v58
    %s61 = scalar_lea.vmem [#allocation0], 6
    %62 = vst.msk [vmem:[%s61] sm:$0xc] %vm59, %v58
    %s63 = scalar_lea.vmem %s0, 3
    %s64 = smov 3
    %v65 = vld [vmem:[%s63] ss:$16 sm:%s64]
    %s66 = scalar_lea.vmem %s0, 4294967275
    %s67 = smov 12
    %v68 = vld [vmem:[%s66] ss:$16 sm:%s67]
    %vm69 = vcmask 1043458
    %v70 = vsel %vm69, %v68, %v65
    %71 = vrot.lane.b32.xlu0 %v70, 48
    %v72 = vpop.permute.xlu0 %71
    %vm73 = vcmask 523648
    %74 = vst.msk [vmem:[#allocation0] sm:$0x3] %vm73, %v72
    %s75 = scalar_lea.vmem [#allocation0], 6
    %76 = vst.msk [vmem:[%s75] sm:$0xc] %vm73, %v72
    %s77 = scalar_lea.vmem %s0, 2
    %s78 = smov 3
    %v79 = vld [vmem:[%s77] ss:$16 sm:%s78]
    %s80 = scalar_lea.vmem %s0, 4294967274
    %s81 = smov 12
    %v82 = vld [vmem:[%s80] ss:$16 sm:%s81]
    %vm83 = vcmask 1043458
    %v84 = vsel %vm83, %v82, %v79
    %85 = vrot.lane.b32.xlu0 %v84, 32
    %v86 = vpop.permute.xlu0 %85
    %vm87 = vcmask 392448
    %88 = vst.msk [vmem:[#allocation0] sm:$0x3] %vm87, %v86
    %s89 = scalar_lea.vmem [#allocation0], 6
    %90 = vst.msk [vmem:[%s89] sm:$0xc] %vm87, %v86
    %s91 = scalar_lea.vmem %s0, 1
    %s92 = smov 3
    %v93 = vld [vmem:[%s91] ss:$16 sm:%s92]
    %s94 = scalar_lea.vmem %s0, 4294967273
    %s95 = smov 12
    %v96 = vld [vmem:[%s94] ss:$16 sm:%s95]
    %vm97 = vcmask 1043458
    %v98 = vsel %vm97, %v96, %v93
    %99 = vrot.lane.b32.xlu0 %v98, 16
    %v100 = vpop.permute.xlu0 %99
    %vm101 = vcmask 261248
    %102 = vst.msk [vmem:[#allocation0] sm:$0x3] %vm101, %v100
    %s103 = scalar_lea.vmem [#allocation0], 6
    %104 = vst.msk [vmem:[%s103] sm:$0xc] %vm101, %v100
    %s106 = sshllo.u32 0, 2
    %v108 = vld [vmem:[#allocation0] sm:%s106]
    %s109 = sshllo.u32 0, 2
    %110 = vst [vmem:[%s1] sm:%s109] %v108
    %s111 = scalar_lea.vmem [#allocation0], 8
    %v112 = vld [vmem:[%s111] sm:%s106]
    %s113 = sshllo.u32 0, 2
    %s114 = scalar_lea.vmem %s1, 2
    %115 = vst [vmem:[%s114] sm:%s113] %v112

// kernel: neg.3
$region0: #{neg.3}
  #allocation0 [shape = 's32[1]{0}', space=sflag, size = 0x4, scoped, tag = 'scoped memory for neg.3']
  %s0 = inlined_call_operand.vmem [shape: f32[2,256], index: 0, kind: input, shape index: {}]
  %s1 = inlined_call_operand.vmem [shape: f32[2,256], index: 1, kind: output, shape index: {}]
  %v2 = vld [vmem:[%s0] sm:$0x3]
  %3 = xla_tuple %v2
  %4 = xla_tuple %3
  %v5 = vxor.u32 %v2, 2147483648
  %6 = xla_tuple %v5
  %7 = vst [vmem:[%s1] sm:$0x3] %v5
  %s8 = scalar_lea.vmem %s0, 2
  %v9 = vld [vmem:[%s8] sm:$0x3]
  %10 = xla_tuple %v9
  %11 = xla_tuple %10
  %v12 = vxor.u32 %v9, 2147483648
  %13 = xla_tuple %v12
  %s14 = scalar_lea.vmem %s1, 2
  %15 = vst [vmem:[%s14] sm:$0x3] %v12

// kernel: ct_loss.1
$region0: #{ct_loss.1}
  #allocation0 [shape = 'u32[]', space=smem, size = 0x4, offset = 0x4, fixed_abs, tag = 'smem constant byte address 0x4 - core index']
  #allocation1 [shape = 'u32[144,128]{1,0:T(1,128)}', space=vmem, size = 0x12000, scoped, tag = 'internal scratch']
  #allocation2 [shape = 's32[1]{0}', space=sflag, size = 0x4, scoped, tag = 'scoped memory for ct_loss.1']
  #allocation3 [shape = 'u8[512]{0}', space=smem, size = 0x200, scoped, tag = 'prefetched SMEM operand 0']
  #allocation4 [shape = 'u8[512]{0}', space=smem, size = 0x200, scoped, tag = 'prefetched SMEM operand 1']
  %s0 = inlined_call_operand.vmem [shape: f32[2], index: 0, kind: input, shape index: {}]
  %s1 = inlined_call_operand.vmem [shape: f32[2], index: 1, kind: input, shape index: {}]
  %s2 = inlined_call_operand.vmem [shape: f32[2,2,128], index: 2, kind: input, shape index: {}]
  %s3 = inlined_call_operand.vmem [shape: f32[2,2,128], index: 3, kind: input, shape index: {}]
  %s4 = inlined_call_operand.vmem [shape: f32[2,2,128], index: 4, kind: input, shape index: {}]
  %s5 = inlined_call_operand.vmem [shape: f32[2,2,128], index: 5, kind: input, shape index: {}]
  %s6 = inlined_call_operand.vmem [shape: f32[2,2,2,128], index: 6, kind: input, shape index: {}]
  %s7 = inlined_call_operand.vmem [shape: f32[2,2,2,128], index: 7, kind: input, shape index: {}]
  %s8 = inlined_call_operand.vmem [shape: f32[1,2,128], index: 8, kind: output, shape index: {0}]
  %s9 = inlined_call_operand.vmem [shape: f32[1,2,128], index: 9, kind: output, shape index: {1}]
  %s10 = inlined_call_operand.vmem [shape: f32[1,2,128], index: 10, kind: output, shape index: {2}]
  %s11 = inlined_call_operand.vmem [shape: f32[1,2,128], index: 11, kind: output, shape index: {3}]
  %s12 = inlined_call_operand.vmem [shape: f32[1,2,128], index: 12, kind: output, shape index: {4}]
  %13 = xla_tuple %s8, %s9, %s10, %s11, %s12
  %s14 = sld [smem:[#allocation0]]
  $region70: #{ct_loss.1} parent=0
    _
  %s16 = ssub.s32 1, %s14
  %s17 = scalar_select 0, %s16, %s14
  %s18 = sshll.u32 %s0, 4
  %s19 = int_to_ptr.vmem [resolvable:$true] %s18
  %21 = dma.vmem_to_smem %s19, 16, [#allocation3], [#allocation2]
  %s22 = sshll.u32 %s1, 4
  %s23 = int_to_ptr.vmem [resolvable:$true] %s22
  %25 = dma.vmem_to_smem %s23, 16, [#allocation4], [#allocation2]
  %26 = dma.done [#allocation2], 32
  %27 = sfence
  // Predicated region
  $region2: #{ct_loss.1} parent=0 // pred_check
    _
  $region3: #{ct_loss.1} parent=0 // pred_check_branch
    %29 = sbr.rel (0) target = $region5
  $region4: #{ct_loss.1} parent=0 // pred_region
    %s30 = sadd.s32 0, 0
    %p31 = scmp.lt.s32.totalorder %s30, 0
    %s32 = scalar_select %p31, %s30, 0
    %s33 = smul.addr %s32, 2
    %s34 = scalar_lea.vmem %s2, %s33
    %s35 = sadd.s32 0, 0
  $region5: #{ct_loss.1} parent=0 // pred_fallthru
    _
  // Predicated region
  $region6: #{ct_loss.1} parent=0 // pred_check
    _
  $region7: #{ct_loss.1} parent=0 // pred_check_branch
    %37 = sbr.rel (0) target = $region9
  $region8: #{ct_loss.1} parent=0 // pred_region
    %s38 = sadd.s32 0, 0
    %p39 = scmp.lt.s32.totalorder %s38, 0
    %s40 = scalar_select %p39, %s38, 0
    %s41 = smul.addr %s40, 2
    %s42 = scalar_lea.vmem %s3, %s41
    %s43 = sadd.s32 0, 0
  $region9: #{ct_loss.1} parent=0 // pred_fallthru
    _
  // Predicated region
  $region10: #{ct_loss.1} parent=0 // pred_check
    _
  $region11: #{ct_loss.1} parent=0 // pred_check_branch
    %45 = sbr.rel (0) target = $region13
  $region12: #{ct_loss.1} parent=0 // pred_region
    %s46 = sadd.s32 0, 0
    %p47 = scmp.lt.s32.totalorder %s46, 0
    %s48 = scalar_select %p47, %s46, 0
    %s49 = smul.addr %s48, 2
    %s50 = scalar_lea.vmem %s4, %s49
    %s51 = sadd.s32 0, 0
  $region13: #{ct_loss.1} parent=0 // pred_fallthru
    _
  // Predicated region
  $region14: #{ct_loss.1} parent=0 // pred_check
    _
  $region15: #{ct_loss.1} parent=0 // pred_check_branch
    %53 = sbr.rel (0) target = $region17
  $region16: #{ct_loss.1} parent=0 // pred_region
    %s54 = sadd.s32 0, 0
    %p55 = scmp.lt.s32.totalorder %s54, 0
    %s56 = scalar_select %p55, %s54, 0
    %s57 = smul.addr %s56, 2
    %s58 = scalar_lea.vmem %s5, %s57
    %s59 = sadd.s32 0, 0
  $region17: #{ct_loss.1} parent=0 // pred_fallthru
    _
  // Predicated region
  $region18: #{ct_loss.1} parent=0 // pred_check
    _
  $region19: #{ct_loss.1} parent=0 // pred_check_branch
    %61 = sbr.rel (0) target = $region21
  $region20: #{ct_loss.1} parent=0 // pred_region
    %s62 = sadd.s32 0, 0
    %p63 = scmp.lt.s32.totalorder %s62, 0
    %s64 = scalar_select %p63, %s62, 0
    %s65 = smul.addr %s64, 2
    %s66 = scalar_lea.vmem %s6, %s65
    %s67 = sadd.s32 0, 0
  $region21: #{ct_loss.1} parent=0 // pred_fallthru
    _
  // Predicated region
  $region22: #{ct_loss.1} parent=0 // pred_check
    _
  $region23: #{ct_loss.1} parent=0 // pred_check_branch
    %69 = sbr.rel (0) target = $region25
  $region24: #{ct_loss.1} parent=0 // pred_region
    %s70 = sadd.s32 0, 0
    %p71 = scmp.lt.s32.totalorder %s70, 0
    %s72 = scalar_select %p71, %s70, 0
    %s73 = smul.addr %s72, 2
    %s74 = scalar_lea.vmem %s7, %s73
    %s75 = sadd.s32 0, 0
  $region25: #{ct_loss.1} parent=0 // pred_fallthru
    _
  %s76 = sadd.s32 0, 0
  %p77 = scmp.lt.s32.totalorder %s76, 0
  %s78 = scalar_select %p77, %s76, 0
  %s79 = smul.addr %s78, 2
  %s80 = scalar_lea.vmem %s2, %s79
  %s81 = sadd.s32 0, 0
  %p82 = scmp.lt.s32.totalorder %s81, 0
  %s83 = scalar_select %p82, %s81, 0
  %s84 = smul.addr %s83, 2
  %s85 = scalar_lea.vmem %s3, %s84
  %s86 = sadd.s32 0, 0
  %p87 = scmp.lt.s32.totalorder %s86, 0
  %s88 = scalar_select %p87, %s86, 0
  %s89 = smul.addr %s88, 2
  %s90 = scalar_lea.vmem %s4, %s89
  %s91 = sadd.s32 0, 0
  %p92 = scmp.lt.s32.totalorder %s91, 0
  %s93 = scalar_select %p92, %s91, 0
  %s94 = smul.addr %s93, 2
  %s95 = scalar_lea.vmem %s5, %s94
  %s96 = sadd.s32 0, 0
  %p97 = scmp.lt.s32.totalorder %s96, 0
  %s98 = scalar_select %p97, %s96, 0
  %s99 = smul.addr %s98, 2
  %s100 = scalar_lea.vmem %s6, %s99
  %s101 = sadd.s32 0, 0
  %p102 = scmp.lt.s32.totalorder %s101, 0
  %s103 = scalar_select %p102, %s101, 0
  %s104 = smul.addr %s103, 2
  %s105 = scalar_lea.vmem %s7, %s104
  %s106 = sadd.s32 0, 0
  %p107 = scmp.lt.s32.totalorder %s106, 0
  %s108 = scalar_select %p107, %s106, 0
  %s109 = smul.addr %s108, 2
  %s110 = scalar_lea.vmem %s2, %s109
  %s111 = sadd.s32 0, 0
  %s112 = sadd.s32 0, 0
  %p113 = scmp.lt.s32.totalorder %s112, 0
  %s114 = scalar_select %p113, %s112, 0
  %s115 = smul.addr %s114, 2
  %s116 = scalar_lea.vmem %s3, %s115
  %s117 = sadd.s32 0, 0
  %s118 = sadd.s32 0, 0
  %p119 = scmp.lt.s32.totalorder %s118, 0
  %s120 = scalar_select %p119, %s118, 0
  %s121 = smul.addr %s120, 2
  %s122 = scalar_lea.vmem %s4, %s121
  %s123 = sadd.s32 0, 0
  %s124 = sadd.s32 0, 0
  %p125 = scmp.lt.s32.totalorder %s124, 0
  %s126 = scalar_select %p125, %s124, 0
  %s127 = smul.addr %s126, 2
  %s128 = scalar_lea.vmem %s5, %s127
  %s129 = sadd.s32 0, 0
  %s130 = sadd.s32 0, 0
  %p131 = scmp.lt.s32.totalorder %s130, 0
  %s132 = scalar_select %p131, %s130, 0
  %s133 = smul.addr %s132, 2
  %s134 = scalar_lea.vmem %s6, %s133
  %s135 = sadd.s32 0, 0
  %s136 = sadd.s32 0, 0
  %p137 = scmp.lt.s32.totalorder %s136, 0
  %s138 = scalar_select %p137, %s136, 0
  %s139 = smul.addr %s138, 2
  %s140 = scalar_lea.vmem %s7, %s139
  %s141 = sadd.s32 0, 0
  %p142 = scmp.eq.s32.totalorder 0, 0
  // Predicated region
  $region26: #{ct_loss.1} parent=0 // pred_check
    %p143 = pneg %p142
  $region27: #{ct_loss.1} parent=0 // pred_check_branch
    %145 = sbr.rel (%p143) target = $region29
  $region28: #{ct_loss.1} parent=0 // pred_region
    %146 = vst [vmem:[%s8] sm:$0x3] 0.0
    %147 = vst [vmem:[%s9] sm:$0x3] 0.0
    %148 = vst [vmem:[%s10] sm:$0x3] 0.0
    %149 = vst [vmem:[%s11] sm:$0x3] 0.0
    %150 = vst [vmem:[%s12] sm:$0x3] 0.0
  $region29: #{ct_loss.1} parent=0 // pred_fallthru
    _
  %v151 = vld [vmem:[%s110] sm:$0x3]
  %v152 = vld [vmem:[%s110 + $0x2] sm:$0x3]
  %v153 = vld [vmem:[%s116] sm:$0x3]
  %v154 = vld [vmem:[%s116 + $0x2] sm:$0x3]
  %v155 = vld [vmem:[%s122] sm:$0x3]
  %v156 = vld [vmem:[%s122 + $0x2] sm:$0x3]
  %v157 = vld [vmem:[%s128] sm:$0x3]
  %v158 = vld [vmem:[%s128 + $0x2] sm:$0x3]
  %v159 = vld [vmem:[%s134] sm:$0x3]
  %v160 = vld [vmem:[%s134 + $0x2] sm:$0x3]
  %v161 = vld [vmem:[%s134 + $0x4] sm:$0x3]
  %v162 = vld [vmem:[%s134 + $0x6] sm:$0x3]
  %v163 = vld [vmem:[%s140] sm:$0x3]
  %v164 = vld [vmem:[%s140 + $0x2] sm:$0x3]
  %v165 = vld [vmem:[%s140 + $0x4] sm:$0x3]
  %v166 = vld [vmem:[%s140 + $0x6] sm:$0x3]
  %v167 = vsub.f32 %v159, %v163
  %v168 = vsub.f32 %v161, %v165
  %v169 = vand.u32 2147483647, %v167
  %v170 = vand.u32 2147483647, %v168
  %v171 = vmul.f32 %v169, %v157
  %v172 = vmul.f32 %v170, %v158
  %vm173 = vcmp.lt.f32.partialorder %v171, 0.1
  %vm174 = vcmp.lt.f32.partialorder %v172, 0.1
  %v175 = vmul.f32 %v171, 0.5
  %v176 = vmul.f32 %v172, 0.5
  %v177 = vmul.f32 %v175, %v171
  %v178 = vmul.f32 %v176, %v172
  %v179 = vrcp.pop 0.1
  %v180 = vmul.f32 %v177, %v179
  %v181 = vmul.f32 %v178, %v179
  %v182 = vsub.f32 %v171, 0.05
  %v183 = vsub.f32 %v172, 0.05
  %v184 = vsel %vm173, %v180, %v182
  %v185 = vsel %vm174, %v181, %v183
  %v186 = vsub.f32 %v160, %v164
  %v187 = vsub.f32 %v162, %v166
  %v188 = vand.u32 2147483647, %v186
  %v189 = vand.u32 2147483647, %v187
  %v190 = vmul.f32 %v188, %v157
  %v191 = vmul.f32 %v189, %v158
  %vm192 = vcmp.lt.f32.partialorder %v190, 0.1
  %vm193 = vcmp.lt.f32.partialorder %v191, 0.1
  %v194 = vmul.f32 %v190, 0.5
  %v195 = vmul.f32 %v191, 0.5
  %v196 = vmul.f32 %v194, %v190
  %v197 = vmul.f32 %v195, %v191
  %v198 = vmul.f32 %v196, %v179
  %v199 = vmul.f32 %v197, %v179
  %v200 = vsub.f32 %v190, 0.05
  %v201 = vsub.f32 %v191, 0.05
  %v202 = vsel %vm192, %v198, %v200
  %v203 = vsel %vm193, %v199, %v201
  %v204 = vadd.f32 %v184, %v202
  %v205 = vadd.f32 %v185, %v203
  %v206 = vld [vmem:[%s11] sm:$0x3]
  %vm207 = vcmask 1041408
  %v208 = vsel %vm207, %v204, 0.0
  %v209 = vrot.slane %v208, 4
  %v210 = vadd.f32 %v208, %v209
  %v211 = vrot.slane %v210, 2
  %v212 = vadd.f32 %v210, %v211
  %v213 = vrot.slane %v212, 1
  %v214 = vadd.f32 %v212, %v213
  %v215 = vsel %vm207, %v205, 0.0
  %v216 = vrot.slane %v215, 4
  %v217 = vadd.f32 %v215, %v216
  %v218 = vrot.slane %v217, 2
  %v219 = vadd.f32 %v217, %v218
  %v220 = vrot.slane %v219, 1
  %v221 = vadd.f32 %v219, %v220
  %vm224 = vcmask 1041409
  %v225 = vsel %vm224, %v221, %v214
  %v227 = vadd.f32 %v206, %v225
  %228 = vst [vmem:[%s11] sm:$0x3] %v227
  %v229 = vld [vmem:[%s12] sm:$0x3]
  %v230 = vsel %vm207, %v157, 0.0
  %v231 = vrot.slane %v230, 4
  %v232 = vadd.f32 %v230, %v231
  %v233 = vrot.slane %v232, 2
  %v234 = vadd.f32 %v232, %v233
  %v235 = vrot.slane %v234, 1
  %v236 = vadd.f32 %v234, %v235
  %v237 = vsel %vm207, %v158, 0.0
  %v238 = vrot.slane %v237, 4
  %v239 = vadd.f32 %v237, %v238
  %v240 = vrot.slane %v239, 2
  %v241 = vadd.f32 %v239, %v240
  %v242 = vrot.slane %v241, 1
  %v243 = vadd.f32 %v241, %v242
  %v246 = vsel %vm224, %v243, %v236
  %v248 = vadd.f32 %v229, %v246
  %249 = vst [vmem:[%s12] sm:$0x3] %v248
  %s250 = sld [smem:[#allocation3]]
  %s251 = sld [smem:[#allocation4]]
  %v252 = vstv %s250
  %vm253 = vcmp.ge.f32.partialorder %v151, %v252
  %vm254 = vcmp.gt.f32.partialorder %v153, 0.5
  %vm255 = vmor %vm253, %vm254
  %vm256 = vcmp.gt.f32.partialorder %v155, 0.5
  %vm257 = vmand %vm255, %vm256
  %v258 = vsel %vm257, 1.0, 0.0
  %v259 = vsub.f32 %v258, %v155
  %v260 = vstv %s251
  %v261 = vmul.f32 %v260, %v259
  %v262 = vadd.f32 %v155, %v261
  %s263 = sld [smem:[#allocation3 + $0x1]]
  %s264 = sld [smem:[#allocation4 + $0x1]]
  %v265 = vstv %s263
  %vm266 = vcmp.ge.f32.partialorder %v152, %v265
  %vm267 = vcmp.gt.f32.partialorder %v154, 0.5
  %vm268 = vmor %vm266, %vm267
  %vm269 = vcmp.gt.f32.partialorder %v156, 0.5
  %vm270 = vmand %vm268, %vm269
  %v271 = vsel %vm270, 1.0, 0.0
  %v272 = vsub.f32 %v271, %v156
  %v273 = vstv %s264
  %v274 = vmul.f32 %v273, %v272
  %v275 = vadd.f32 %v156, %v274
  %v276 = vxor.u32 %v151, 2147483648
  %v277 = vxor.u32 %v152, 2147483648
  %v278 = vmul.f32 %v276, 1.442695
  %v279 = vpow.pop %v278
  %v280 = vmul.f32 %v277, 1.442695
  %v281 = vpow.pop %v280
  %v282 = vadd.f32 %v279, 1.0
  %v283 = vadd.f32 %v281, 1.0
  %v284 = vrcp.pop %v282
  %v285 = vmul.f32 1.0, %v284
  %v286 = vrcp.pop %v283
  %v287 = vmul.f32 1.0, %v286
  %v288 = vmul.f32 %v285, %v262
  %v289 = vmul.f32 %v287, %v275
  %v290 = vmul.f32 %v153, %v262
  %v291 = vmul.f32 %v154, %v275
  %v292 = vld [vmem:[%s8] sm:$0x3]
  %v293 = vmul.f32 %v288, %v290
  %v294 = vmul.f32 %v289, %v291
  %v295 = vsel %vm207, %v293, 0.0
  %v296 = vrot.slane %v295, 4
  %v297 = vadd.f32 %v295, %v296
  %v298 = vrot.slane %v297, 2
  %v299 = vadd.f32 %v297, %v298
  %v300 = vrot.slane %v299, 1
  %v301 = vadd.f32 %v299, %v300
  %v302 = vsel %vm207, %v294, 0.0
  %v303 = vrot.slane %v302, 4
  %v304 = vadd.f32 %v302, %v303
  %v305 = vrot.slane %v304, 2
  %v306 = vadd.f32 %v304, %v305
  %v307 = vrot.slane %v306, 1
  %v308 = vadd.f32 %v306, %v307
  %v311 = vsel %vm224, %v308, %v301
  %v313 = vadd.f32 %v292, %v311
  %314 = vst [vmem:[%s8] sm:$0x3] %v313
  %v315 = vld [vmem:[%s9] sm:$0x3]
  %v316 = vmul.f32 %v288, %v288
  %v317 = vmul.f32 %v289, %v289
  %v318 = vsel %vm207, %v316, 0.0
  %v319 = vrot.slane %v318, 4
  %v320 = vadd.f32 %v318, %v319
  %v321 = vrot.slane %v320, 2
  %v322 = vadd.f32 %v320, %v321
  %v323 = vrot.slane %v322, 1
  %v324 = vadd.f32 %v322, %v323
  %v325 = vsel %vm207, %v317, 0.0
  %v326 = vrot.slane %v325, 4
  %v327 = vadd.f32 %v325, %v326
  %v328 = vrot.slane %v327, 2
  %v329 = vadd.f32 %v327, %v328
  %v330 = vrot.slane %v329, 1
  %v331 = vadd.f32 %v329, %v330
  %v334 = vsel %vm224, %v331, %v324
  %v336 = vadd.f32 %v315, %v334
  %337 = vst [vmem:[%s9] sm:$0x3] %v336
  %v338 = vld [vmem:[%s10] sm:$0x3]
  %v339 = vmul.f32 %v290, %v290
  %v340 = vmul.f32 %v291, %v291
  %v341 = vsel %vm207, %v339, 0.0
  %v342 = vrot.slane %v341, 4
  %v343 = vadd.f32 %v341, %v342
  %v344 = vrot.slane %v343, 2
  %v345 = vadd.f32 %v343, %v344
  %v346 = vrot.slane %v345, 1
  %v347 = vadd.f32 %v345, %v346
  %v348 = vsel %vm207, %v340, 0.0
  %v349 = vrot.slane %v348, 4
  %v350 = vadd.f32 %v348, %v349
  %v351 = vrot.slane %v350, 2
  %v352 = vadd.f32 %v350, %v351
  %v353 = vrot.slane %v352, 1
  %v354 = vadd.f32 %v352, %v353
  %v357 = vsel %vm224, %v354, %v347
  %v359 = vadd.f32 %v338, %v357
  %360 = vst [vmem:[%s10] sm:$0x3] %v359
  // Predicated region
  $region30: #{ct_loss.1} parent=0 // pred_check
    _
  $region31: #{ct_loss.1} parent=0 // pred_check_branch
    %362 = sbr.rel (0) target = $region33
  $region32: #{ct_loss.1} parent=0 // pred_region
    _
  $region33: #{ct_loss.1} parent=0 // pred_fallthru
    _
  // Predicated region
  $region34: #{ct_loss.1} parent=0 // pred_check
    _
  $region35: #{ct_loss.1} parent=0 // pred_check_branch
    %364 = sbr.rel (0) target = $region37
  $region36: #{ct_loss.1} parent=0 // pred_region
    _
  $region37: #{ct_loss.1} parent=0 // pred_fallthru
    _
  // Predicated region
  $region38: #{ct_loss.1} parent=0 // pred_check
    _
  $region39: #{ct_loss.1} parent=0 // pred_check_branch
    %366 = sbr.rel (0) target = $region41
  $region40: #{ct_loss.1} parent=0 // pred_region
    _
  $region41: #{ct_loss.1} parent=0 // pred_fallthru
    _
  // Predicated region
  $region42: #{ct_loss.1} parent=0 // pred_check
    _
  $region43: #{ct_loss.1} parent=0 // pred_check_branch
    %368 = sbr.rel (0) target = $region45
  $region44: #{ct_loss.1} parent=0 // pred_region
    _
  $region45: #{ct_loss.1} parent=0 // pred_fallthru
    _
  // Predicated region
  $region46: #{ct_loss.1} parent=0 // pred_check
    _
  $region47: #{ct_loss.1} parent=0 // pred_check_branch
    %370 = sbr.rel (0) target = $region49
  $region48: #{ct_loss.1} parent=0 // pred_region
    _
  $region49: #{ct_loss.1} parent=0 // pred_fallthru
    _
  // Predicated region
  $region50: #{ct_loss.1} parent=0 // pred_check
    _
  $region51: #{ct_loss.1} parent=0 // pred_check_branch
    %372 = sbr.rel (0) target = $region53
  $region52: #{ct_loss.1} parent=0 // pred_region
    _
  $region53: #{ct_loss.1} parent=0 // pred_fallthru
    _
  // Predicated region
  $region54: #{ct_loss.1} parent=0 // pred_check
    _
  $region55: #{ct_loss.1} parent=0 // pred_check_branch
    %374 = sbr.rel (0) target = $region57
  $region56: #{ct_loss.1} parent=0 // pred_region
    _
  $region57: #{ct_loss.1} parent=0 // pred_fallthru
    _
  // Predicated region
  $region58: #{ct_loss.1} parent=0 // pred_check
    _
  $region59: #{ct_loss.1} parent=0 // pred_check_branch
    %376 = sbr.rel (0) target = $region61
  $region60: #{ct_loss.1} parent=0 // pred_region
    _
  $region61: #{ct_loss.1} parent=0 // pred_fallthru
    _
  // Predicated region
  $region62: #{ct_loss.1} parent=0 // pred_check
    _
  $region63: #{ct_loss.1} parent=0 // pred_check_branch
    %378 = sbr.rel (0) target = $region65
  $region64: #{ct_loss.1} parent=0 // pred_region
    _
  $region65: #{ct_loss.1} parent=0 // pred_fallthru
    _
  // Predicated region
  $region66: #{ct_loss.1} parent=0 // pred_check
    _
  $region67: #{ct_loss.1} parent=0 // pred_check_branch
    %380 = sbr.rel (0) target = $region69
  $region68: #{ct_loss.1} parent=0 // pred_region
    _
  $region69: #{ct_loss.1} parent=0 // pred_fallthru
    _

</llo_original>
